<compile_context>
chip_gen: v6e
topology: v6e:2x2x1
jax: 0.10.0
libtpu: 0.0.40
codegen_flags: <defaults>
</compile_context>

<pallas_src>
import jax
import jax.numpy as jnp
from jax.experimental import pallas as pl
from jax.experimental.pallas import tpu as pltpu


def _round_up(x, m):
    return ((x + m - 1) // m) * m


def _cdiv(a, b):
    return -(-a // b)


def _gelu_epilogue(y):
    # y * sigmoid(1.702*y): exp and the approximate reciprocal both run on the EUP.
    return y * pl.reciprocal(1.0 + jnp.exp(-1.702 * y), approx=True)


def _fused_kernel(x_ref, w_ref, b_ref, o_ref):
    # Single K block: one MXU contraction (RHS kept in native (N, K) layout),
    # + bias + x*sigmoid(1.702*x), fully fused.
    y = jax.lax.dot_general(
        x_ref[...], w_ref[...],
        dimension_numbers=(((1,), (1,)), ((), ())),
        preferred_element_type=jnp.float32)
    y = y + b_ref[...].astype(jnp.float32)
    o_ref[...] = _gelu_epilogue(y).astype(o_ref.dtype)


def _ktiled_kernel(x_ref, w_ref, b_ref, o_ref, acc_ref):
    # K-tiled: accumulate partial contractions in a VMEM f32 accumulator,
    # apply bias + activation epilogue on the last K step.
    k = pl.program_id(2)

    @pl.when(k == 0)
    def _():
        acc_ref[...] = jnp.zeros_like(acc_ref)

    acc_ref[...] += jax.lax.dot_general(
        x_ref[...], w_ref[...],
        dimension_numbers=(((1,), (1,)), ((), ())),
        preferred_element_type=jnp.float32)

    @pl.when(k == pl.num_programs(2) - 1)
    def _():
        y = acc_ref[...] + b_ref[...].astype(jnp.float32)
        o_ref[...] = _gelu_epilogue(y).astype(o_ref.dtype)


def _tpu_config():
    """(tile_m, tile_n, tile_k, vmem_cap_bytes) per TPU generation."""
    kind = ""
    try:
        kind = jax.devices()[0].device_kind.lower()
    except Exception:
        pass
    vmem_phys = None
    try:
        vmem_phys = int(pltpu.get_tpu_info().vmem_capacity_bytes)
    except Exception:
        pass

    if "v5 lite" in kind or "v5e" in kind or "v5litepod" in kind:
        tm, tn, tk = 256, 256, 1024
        phys = vmem_phys or (128 << 20)
    elif "v6" in kind:                    # v6e / Trillium: 128 MiB VMEM -> big tiles
        tm, tn, tk = 512, 512, 1024
        phys = vmem_phys or (128 << 20)
    elif "v7" in kind:                    # v7x: only 64 MiB VMEM -> stay at 256 tiles
        tm, tn, tk = 256, 256, 1024
        phys = vmem_phys or (64 << 20)
    else:                                 # unknown: conservative
        tm, tn, tk = 256, 256, 1024
        phys = vmem_phys or (64 << 20)

    # Leave ~25% headroom for compiler/internal scratch; never claim all of VMEM.
    vmem_cap = max(32 << 20, (phys * 3) // 4)
    return tm, tn, tk, vmem_cap


def _block_spec(shape, index_map, buffer_count=None):
    if buffer_count is not None and hasattr(pl, "Buffered"):
        try:
            return pl.BlockSpec(shape, index_map,
                                pipeline_mode=pl.Buffered(buffer_count))
        except TypeError:
            pass
    return pl.BlockSpec(shape, index_map)


def approximate_gelu(x, weight, bias=None, *, tile_m=None, tile_n=None,
                     tile_k=None, param_dtype=jnp.bfloat16):
    """out = y * sigmoid(1.702 * y), with y = x @ weight.T + bias.

    x: (..., dim_in); weight: (dim_out, dim_in) [torch nn.Linear layout];
    bias: (dim_out,) or None.
    param_dtype: MXU operand dtype for x / weight (default bf16; accumulation and
    the bias/sigmoid epilogue are always f32).  Pass None to keep input dtypes.
    # TODO(synk): quantized operand paths (fp8 on v7x, int8 on v5e/v6e) not implemented.
    """
    dim_out, dim_in = weight.shape
    orig_shape = x.shape
    assert orig_shape[-1] == dim_in
    out_dtype = x.dtype

    tm_pref, tn_pref, tk_pref, vmem_cap = _tpu_config()
    tm = tile_m or tm_pref
    tn = tile_n or tn_pref
    tk = tile_k or tk_pref

    x2d = x.reshape(-1, dim_in)
    m = x2d.shape[0]

    w = weight                                    # native layout: no HBM transpose
    b = bias if bias is not None else jnp.zeros((dim_out,), weight.dtype)
    b = b.reshape(1, dim_out)

    if param_dtype is not None:
        x2d = x2d.astype(param_dtype)
        w = w.astype(param_dtype)

    # ---- tile sizes (clamped to small problems, aligned to (8, 128)) ----
    tile_m = min(tm, _round_up(m, 8))
    tile_n = min(tn, _round_up(dim_out, 128))
    k_tiled = dim_in > tk
    if k_tiled:
        num_k = _cdiv(dim_in, tk)
        tile_k = _round_up(_cdiv(dim_in, num_k), 128)   # minimal K overshoot (<~128)
        k_pad = num_k * tile_k
    else:
        num_k = 1
        tile_k = dim_in
        k_pad = dim_in

    # ---- pad to tile multiples (zero padding is exact for the matmul) ----
    m_pad = _round_up(m, tile_m)
    n_pad = _round_up(dim_out, tile_n)

    if m_pad != m or k_pad != dim_in:
        x2d = jnp.pad(x2d, ((0, m_pad - m), (0, k_pad - dim_in)))
    if n_pad != dim_out or k_pad != dim_in:
        w = jnp.pad(w, ((0, n_pad - dim_out), (0, k_pad - dim_in)))
    if n_pad != dim_out:
        b = jnp.pad(b, ((0, 0), (0, n_pad - dim_out)))

    num_m = m_pad // tile_m
    num_n = n_pad // tile_n

    # ---- explicit VMEM budget: (multi-)buffered tiles + accumulator, headroom ----
    x_bytes = x2d.dtype.itemsize
    w_bytes = w.dtype.itemsize
    o_bytes = jnp.dtype(out_dtype).itemsize
    est_vmem = (3 * tile_m * tile_k * x_bytes
                + 3 * tile_n * tile_k * w_bytes
                + 2 * tile_m * tile_n * o_bytes
                + 2 * 8 * tile_n * b.dtype.itemsize     # bias sublane-padded to 8 rows
                + tile_m * tile_n * 4)                  # f32 accumulator
    vmem_limit = int(min(max(2 * est_vmem, 32 << 20), vmem_cap))

    cost = pl.CostEstimate(
        flops=2 * m * dim_out * dim_in,
        transcendentals=m * dim_out,
        bytes_accessed=int(m * dim_in * x_bytes + dim_out * dim_in * w_bytes
                           + dim_out * b.dtype.itemsize + m * dim_out * o_bytes))

    # Order the grid so the axis with more blocks is the leading "parallel" axis
    # (both v7x TensorCores get work); the other operand stays resident in VMEM.
    m_first = num_m >= num_n

    if num_k == 1:
        if m_first:
            grid = (num_m, num_n)
            x_map = lambda i, n: (i, 0)
            w_map = lambda i, n: (n, 0)
            b_map = lambda i, n: (0, n)
            o_map = lambda i, n: (i, n)
            inner_steps, stream_w = num_n, True     # w streams along inner axis
        else:
            grid = (num_n, num_m)
            x_map = lambda n, i: (i, 0)
            w_map = lambda n, i: (n, 0)
            b_map = lambda n, i: (0, n)
            o_map = lambda n, i: (i, n)
            inner_steps, stream_w = num_m, False    # x streams along inner axis
        nbuf = 3 if inner_steps >= 3 else None      # deeper buffering on the streamed operand
        grid_spec = pltpu.PrefetchScalarGridSpec(
            num_scalar_prefetch=0,
            grid=grid,
            in_specs=[
                _block_spec((tile_m, k_pad), x_map, None if stream_w else nbuf),
                _block_spec((tile_n, k_pad), w_map, nbuf if stream_w else None),
                _block_spec((1, tile_n), b_map),
            ],
            out_specs=_block_spec((tile_m, tile_n), o_map),
        )
        kernel = _fused_kernel
        dims = ("parallel", "parallel")
    else:
        if m_first:
            grid = (num_m, num_n, num_k)
            x_map = lambda i, n, k: (i, k)
            w_map = lambda i, n, k: (n, k)
            b_map = lambda i, n, k: (0, n)
            o_map = lambda i, n, k: (i, n)
        else:
            grid = (num_n, num_m, num_k)
            x_map = lambda n, i, k: (i, k)
            w_map = lambda n, i, k: (n, k)
            b_map = lambda n, i, k: (0, n)
            o_map = lambda n, i, k: (i, n)
        grid_spec = pltpu.PrefetchScalarGridSpec(
            num_scalar_prefetch=0,
            grid=grid,
            in_specs=[
                _block_spec((tile_m, tile_k), x_map),
                _block_spec((tile_n, tile_k), w_map),
                _block_spec((1, tile_n), b_map),
            ],
            out_specs=_block_spec((tile_m, tile_n), o_map),
            scratch_shapes=[pltpu.VMEM((tile_m, tile_n), jnp.float32)],
        )
        kernel = _ktiled_kernel
        dims = ("parallel", "parallel", "arbitrary")

    out = pl.pallas_call(
        kernel,
        out_shape=jax.ShapeDtypeStruct((m_pad, n_pad), out_dtype),
        grid_spec=grid_spec,
        compiler_params=pltpu.CompilerParams(
            dimension_semantics=dims,
            vmem_limit_bytes=vmem_limit),
        cost_estimate=cost,
    )(x2d, w, b)

    out = out[:m, :dim_out]
    return out.reshape(*orig_shape[:-1], dim_out)


if __name__ == "__main__":
    key = jax.random.PRNGKey(0)
    k1, k2, k3, k4, k5, k6, k7, k8, k9 = jax.random.split(key, 9)

    def ref_gelu(x, w, b):
        # Reference with the same bf16 operand quantization the kernel uses.
        xc = x.astype(jnp.bfloat16).astype(jnp.float32)
        wc = w.astype(jnp.bfloat16).astype(jnp.float32)
        y = xc @ wc.T + b
        return y * jax.nn.sigmoid(1.702 * y)

    # ---- Test 1: small shapes consistent with the module (fused, single-K path) ----
    batch, seq, dim_in, dim_out = 2, 8, 32, 32
    x = jax.random.normal(k1, (batch, seq, dim_in), dtype=jnp.float32)
    weight = jax.random.normal(k2, (dim_out, dim_in), dtype=jnp.float32) * 0.05
    bias = jax.random.normal(k3, (dim_out,), dtype=jnp.float32) * 0.01

    out = approximate_gelu(x, weight, bias)
    jax.block_until_ready(out)
    assert out.shape == (batch, seq, dim_out)
    assert jnp.allclose(out, ref_gelu(x, weight, bias), atol=1e-2, rtol=1e-2), \
        "mismatch vs reference (fused path)"

    # ---- Test 2: large ragged dim_in -> K-tiled accumulator path + minimal K pad ----
    dim_in2, dim_out2 = 2176, 192
    x2 = jax.random.normal(k4, (2, 8, dim_in2), dtype=jnp.float32)
    w2 = jax.random.normal(k5, (dim_out2, dim_in2), dtype=jnp.float32) * 0.02
    b2 = jax.random.normal(k6, (dim_out2,), dtype=jnp.float32) * 0.01

    out2 = approximate_gelu(x2, w2, b2)
    jax.block_until_ready(out2)
    assert out2.shape == (2, 8, dim_out2)
    assert jnp.allclose(out2, ref_gelu(x2, w2, b2), atol=2e-2, rtol=2e-2), \
        "mismatch vs reference (K-tiled path)"

    # ---- Test 3: many M/N blocks -> fused multi-block path (Buffered streaming,
    #      megacore-friendly grid ordering) ----
    dim_in3, dim_out3 = 256, 1536
    x3 = jax.random.normal(k7, (8, 512, dim_in3), dtype=jnp.float32)
    w3 = jax.random.normal(k8, (dim_out3, dim_in3), dtype=jnp.float32) * 0.05
    b3 = jax.random.normal(k9, (dim_out3,), dtype=jnp.float32) * 0.01

    out3 = approximate_gelu(x3, w3, b3)
    jax.block_until_ready(out3)
    assert out3.shape == (8, 512, dim_out3)
    assert jnp.allclose(out3, ref_gelu(x3, w3, b3), atol=2e-2, rtol=2e-2), \
        "mismatch vs reference (multi-block fused path)"

    print("KERNEL_OK")
</pallas_src>

<mosaic_0001>
module attributes {stable_mosaic.version = 11 : i64} {
  func.func @_fused_kernel(%arg0: i32, %arg1: i32, %arg2: memref<16x32xbf16, #tpu.memory_space<vmem>>, %arg3: memref<128x32xbf16, #tpu.memory_space<vmem>>, %arg4: memref<1x128xf32, #tpu.memory_space<vmem>>, %arg5: memref<16x128xf32, #tpu.memory_space<vmem>>) attributes {dimension_semantics = [#tpu.dimension_semantics<parallel>, #tpu.dimension_semantics<parallel>], iteration_bounds = array<i64: 1, 1>, scalar_prefetch = 0 : i64, scratch_operands = 0 : i64, tpu.core_type = #tpu.core_type<tc>, window_params = [{transform_indices = @transform_0, window_bounds = array<i64: 16, 32>}, {transform_indices = @transform_1, window_bounds = array<i64: 128, 32>}, {transform_indices = @transform_2, window_bounds = array<i64: 1, 128>}, {transform_indices = @transform_3, window_bounds = array<i64: 16, 128>}]} {
    %c0 = arith.constant 0 : index
    %c0_0 = arith.constant 0 : index
    %0 = vector.load %arg2[%c0, %c0_0] : memref<16x32xbf16, #tpu.memory_space<vmem>>, vector<16x32xbf16>
    %c0_1 = arith.constant 0 : index
    %c0_2 = arith.constant 0 : index
    %1 = vector.load %arg3[%c0_1, %c0_2] : memref<128x32xbf16, #tpu.memory_space<vmem>>, vector<128x32xbf16>
    %cst = arith.constant dense<0.000000e+00> : vector<16x128xf32>
    %2 = tpu.matmul %0, %1, %cst {dimension_numbers = #tpu.dot_dimension_numbers<[1], [1], [0], [0], [0, 0, 1, 0], [], []>} : vector<16x32xbf16>, vector<128x32xbf16>, vector<16x128xf32> -> vector<16x128xf32>
    %c0_3 = arith.constant 0 : index
    %c0_4 = arith.constant 0 : index
    %3 = vector.load %arg4[%c0_3, %c0_4] : memref<1x128xf32, #tpu.memory_space<vmem>>, vector<1x128xf32>
    %4 = vector.broadcast %3 : vector<1x128xf32> to vector<16x128xf32>
    %5 = arith.addf %2, %4 : vector<16x128xf32>
    %cst_5 = arith.constant -1.702000e+00 : f32
    %6 = vector.broadcast %cst_5 : f32 to vector<16x128xf32>
    %7 = arith.mulf %6, %5 : vector<16x128xf32>
    %8 = math.exp %7 : vector<16x128xf32>
    %cst_6 = arith.constant 1.000000e+00 : f32
    %9 = vector.broadcast %cst_6 : f32 to vector<16x128xf32>
    %10 = arith.addf %9, %8 : vector<16x128xf32>
    %11 = tpu.reciprocal %10 {approx = true} : vector<16x128xf32> -> vector<16x128xf32>
    %12 = arith.mulf %5, %11 : vector<16x128xf32>
    %c0_7 = arith.constant 0 : index
    %c0_8 = arith.constant 0 : index
    %13 = vector.load %arg5[%c0_7, %c0_8] : memref<16x128xf32, #tpu.memory_space<vmem>>, vector<16x128xf32>
    tpu.vector_store %arg5[%c0_7, %c0_8], %12 {strides = array<i32>} : memref<16x128xf32, #tpu.memory_space<vmem>>, vector<16x128xf32>,
    return
  }
  func.func @transform_0(%arg0: i32, %arg1: i32) -> (i32, i32) {
    %c0_i32 = arith.constant 0 : i32
    %c0_i32_0 = arith.constant 0 : i32
    return %arg0, %c0_i32 : i32, i32
  }
  func.func @transform_1(%arg0: i32, %arg1: i32) -> (i32, i32) {
    %c0_i32 = arith.constant 0 : i32
    %c0_i32_0 = arith.constant 0 : i32
    return %arg1, %c0_i32 : i32, i32
  }
  func.func @transform_2(%arg0: i32, %arg1: i32) -> (i32, i32) {
    %c0_i32 = arith.constant 0 : i32
    %c0_i32_0 = arith.constant 0 : i32
    return %c0_i32, %arg1 : i32, i32
  }
  func.func @transform_3(%arg0: i32, %arg1: i32) -> (i32, i32) {
    %c0_i32 = arith.constant 0 : i32
    return %arg0, %arg1 : i32, i32
  }
}

</mosaic_0001>

<llo_original>
// kernel: tpu_custom_call.1
$region0: #{tpu_custom_call.1}
  #allocation0 [shape = 'u32[]', space=smem, size = 0x4, offset = 0x4, fixed_abs, tag = 'smem constant byte address 0x4 - core index']
  #allocation1 [shape = 'u32[144,128]{1,0:T(1,128)}', space=vmem, size = 0x12000, scoped, tag = 'internal scratch']
  %s0 = inlined_call_operand.vmem [shape: bf16[16,32], index: 0, kind: input, shape index: {}]
  %s1 = inlined_call_operand.vmem [shape: bf16[128,32], index: 1, kind: input, shape index: {}]
  %s2 = inlined_call_operand.vmem [shape: f32[1,128], index: 2, kind: input, shape index: {}]
  %s3 = inlined_call_operand.hbm [shape: f32[16,128], index: 3, kind: output, shape index: {}]
  %s4 = sld [smem:[#allocation0]]
  $region22: #{tpu_custom_call.1} parent=0
    _
  %s6 = ssub.s32 1, %s4
  %s7 = scalar_select 0, %s6, %s4
  $region1: #{tpu_custom_call.1} parent=0
    #allocation2 [shape = 'u8[8192]{0}', space=vmem, size = 0x2000, scoped, tag = 'output window, operand 0, single buffered']
    #allocation3 [shape = 's32[1]{0}', space=sflag, size = 0x4, scoped, tag = 'scoped memory for tpu_custom_call.1']
    %8 = vsyncpa [#allocation3], 0
    // Predicated region
    $region2: #{tpu_custom_call.1} parent=1 // pred_check
      _
    $region3: #{tpu_custom_call.1} parent=1 // pred_check_branch
      %10 = sbr.rel (0) target = $region5
    $region4: #{tpu_custom_call.1} parent=1 // pred_region
      _
    $region5: #{tpu_custom_call.1} parent=1 // pred_fallthru
      _
    // Predicated region
    $region6: #{tpu_custom_call.1} parent=1 // pred_check
      _
    $region7: #{tpu_custom_call.1} parent=1 // pred_check_branch
      %12 = sbr.rel (0) target = $region9
    $region8: #{tpu_custom_call.1} parent=1 // pred_region
      _
    $region9: #{tpu_custom_call.1} parent=1 // pred_fallthru
      _
    // Predicated region
    $region10: #{tpu_custom_call.1} parent=1 // pred_check
      _
    $region11: #{tpu_custom_call.1} parent=1 // pred_check_branch
      %14 = sbr.rel (0) target = $region13
    $region12: #{tpu_custom_call.1} parent=1 // pred_region
      _
    $region13: #{tpu_custom_call.1} parent=1 // pred_fallthru
      _
    %v16 = vld [vmem:[%s0] sm:$0xf]
    %v17 = vld [vmem:[%s0 + $0x4] sm:$0xf]
    %v18 = vld [vmem:[%s1] sm:$0xf]
    %v19 = vld [vmem:[%s1 + $0x4] sm:$0xf]
    %v20 = vld [vmem:[%s1 + $0x8] sm:$0xf]
    %v21 = vld [vmem:[%s1 + $0xc] sm:$0xf]
    %v22 = vld [vmem:[%s1 + $0x10] sm:$0xf]
    %v23 = vld [vmem:[%s1 + $0x14] sm:$0xf]
    %v24 = vld [vmem:[%s1 + $0x18] sm:$0xf]
    %v25 = vld [vmem:[%s1 + $0x1c] sm:$0xf]
    %v26 = vld [vmem:[%s1 + $0x20] sm:$0xf]
    %v27 = vld [vmem:[%s1 + $0x24] sm:$0xf]
    %v28 = vld [vmem:[%s1 + $0x28] sm:$0xf]
    %v29 = vld [vmem:[%s1 + $0x2c] sm:$0xf]
    %v30 = vld [vmem:[%s1 + $0x30] sm:$0xf]
    %v31 = vld [vmem:[%s1 + $0x34] sm:$0xf]
    %v32 = vld [vmem:[%s1 + $0x38] sm:$0xf]
    %v33 = vld [vmem:[%s1 + $0x3c] sm:$0xf]
    %v34 = vld [vmem:[%s2] sm:$0x1]
    %v36 = vlaneseq
    %v37 = vshrl.u32 %v36, 7
    %v38 = vsub.s32 0, %v37
    %v39 = vrot.slane %v34, %v38
    %v43 = vunpack.c.l.b16 %v16
    %v44 = vunpack.c.l.b16 %v17
    %v45 = vpack.c.b16 %v44, %v43
    %v62 = vunpack.c.l.b16 %v18
    %v63 = vunpack.c.l.b16 %v19
    %v64 = vunpack.c.l.b16 %v20
    %v65 = vunpack.c.l.b16 %v21
    %v66 = vunpack.c.l.b16 %v22
    %v67 = vunpack.c.l.b16 %v23
    %v68 = vunpack.c.l.b16 %v24
    %v69 = vunpack.c.l.b16 %v25
    %v70 = vunpack.c.l.b16 %v26
    %v71 = vunpack.c.l.b16 %v27
    %v72 = vunpack.c.l.b16 %v28
    %v73 = vunpack.c.l.b16 %v29
    %v74 = vunpack.c.l.b16 %v30
    %v75 = vunpack.c.l.b16 %v31
    %v76 = vunpack.c.l.b16 %v32
    %v77 = vunpack.c.l.b16 %v33
    %v78 = vpack.c.b16 %v63, %v62
    %v79 = vpack.c.b16 %v65, %v64
    %v80 = vpack.c.b16 %v67, %v66
    %v81 = vpack.c.b16 %v69, %v68
    %v82 = vpack.c.b16 %v71, %v70
    %v83 = vpack.c.b16 %v73, %v72
    %v84 = vpack.c.b16 %v75, %v74
    %v85 = vpack.c.b16 %v77, %v76
    %vm86 = vcmask 261120
    %v88 = vsel %vm86, %v45, 0
    %v91 = vsel %vm86, %v78, 0
    %v94 = vsel %vm86, %v79, 0
    %v97 = vsel %vm86, %v80, 0
    %v100 = vsel %vm86, %v81, 0
    %v103 = vsel %vm86, %v82, 0
    %v106 = vsel %vm86, %v83, 0
    %v109 = vsel %vm86, %v84, 0
    %v112 = vsel %vm86, %v85, 0
    %114 = vmatprep.subr.bf16.mxu0 0
    %115 = vmatpush1.bf16.xpose.msra.mxu0 %v112
    %116 = vmatprep.subr.bf16.mxu0 0
    %117 = vmatpush1.bf16.xpose.msra.mxu0 %v109
    %118 = vmatprep.subr.bf16.mxu0 0
    %119 = vmatpush1.bf16.xpose.msra.mxu0 %v106
    %120 = vmatprep.subr.bf16.mxu0 0
    %121 = vmatpush1.bf16.xpose.msra.mxu0 %v103
    %122 = vmatprep.subr.bf16.mxu0 0
    %123 = vmatpush1.bf16.xpose.msra.mxu0 %v100
    %124 = vmatprep.subr.bf16.mxu0 0
    %125 = vmatpush1.bf16.xpose.msra.mxu0 %v97
    %126 = vmatprep.subr.bf16.mxu0 0
    %127 = vmatpush1.bf16.xpose.msra.mxu0 %v94
    %128 = vmatprep.subr.bf16.mxu0 0
    %129 = vmatpush1.bf16.xpose.msra.mxu0 %v91
    %130 = vmatprep.subr.bf16.mxu0 0
    %131 = vmatpush2.bf16.xpose.msra.mxu0 0
    %132 = vmatprep.subr.bf16.mxu0 0
    %133 = vmatpush2.bf16.xpose.msra.mxu0 0
    %134 = vmatprep.subr.bf16.mxu0 0
    %135 = vmatpush2.bf16.xpose.msra.mxu0 0
    %136 = vmatprep.subr.bf16.mxu0 0
    %137 = vmatpush2.bf16.xpose.msra.mxu0 0
    %138 = vmatprep.subr.bf16.mxu0 0
    %139 = vmatpush2.bf16.xpose.msra.mxu0 0
    %140 = vmatprep.subr.bf16.mxu0 0
    %141 = vmatpush2.bf16.xpose.msra.mxu0 0
    %142 = vmatprep.subr.bf16.mxu0 0
    %143 = vmatpush2.bf16.xpose.msra.mxu0 0
    %144 = vmatprep.subr.bf16.mxu0 0
    %145 = vmatpush2.bf16.xpose.msra.mxu0 0
    %146 = vmatprep.mubr.bf16.mxu0 0
    %147 = vmatmul.mubr.bf16.gmra.mxu0 %v88
    %v148 = vpop.f32.mrf.mxu0
    %v149 = vadd.f32 %v39, %v148
    %v150 = vpop.f32.mrf.mxu0
    %v151 = vpop.f32.mrf.mxu0
    %v152 = vadd.f32 %v39, %v151
    %v153 = vpop.f32.mrf.mxu0
    %154 = vdwg.mxu0
    %v155 = vmul.f32 %v149, -1.702
    %v156 = vmul.f32 %v152, -1.702
    %v157 = vmul.f32 %v155, 1.442695
    %v158 = vpow.pop %v157
    %v159 = vmul.f32 %v156, 1.442695
    %v160 = vpow.pop %v159
    %v161 = vadd.f32 %v158, 1.0
    %v162 = vadd.f32 %v160, 1.0
    %v163 = vrcp.pop %v161
    %v164 = vrcp.pop %v162
    %v165 = vmul.f32 %v149, %v163
    %v166 = vmul.f32 %v152, %v164
    %167 = vst [vmem:[#allocation2] sm:$0xff] %v165
    %168 = vst [vmem:[#allocation2 + $0x8] sm:$0xff] %v166
    // Predicated region
    $region14: #{tpu_custom_call.1} parent=1 // pred_check
      _
    $region15: #{tpu_custom_call.1} parent=1 // pred_check_branch
      %170 = sbr.rel (0) target = $region17
    $region16: #{tpu_custom_call.1} parent=1 // pred_region
      %s172 = ssub.s32 256, 256
      %173 = vsyncadd [#allocation3], %s172
      %s174 = sshll.u32 [#allocation2], 4
      %s175 = int_to_ptr.vmem [resolvable:$true] %s174
      %180 = dma.vmem_to_hbm [thread:$0]  %s175, 256, %s3, [#allocation3], 128, 128, 8
    $region17: #{tpu_custom_call.1} parent=1 // pred_fallthru
      _
    // Predicated region
    $region18: #{tpu_custom_call.1} parent=1 // pred_check
      _
    $region19: #{tpu_custom_call.1} parent=1 // pred_check_branch
      %182 = sbr.rel (0) target = $region21
    $region20: #{tpu_custom_call.1} parent=1 // pred_region
      %183 = dma.done [#allocation3], 256
    $region21: #{tpu_custom_call.1} parent=1 // pred_fallthru
      _
    %184 = vsyncpa [#allocation3], 1

</llo_original>
